<compile_context>
chip_gen: v6e
topology: v6e:2x2x1
jax: 0.10.0
libtpu: 0.0.40
codegen_flags: <defaults>
</compile_context>

<pallas_src>
import functools

import jax
import jax.numpy as jnp
from jax.experimental import pallas as pl
from jax.experimental.pallas import tpu as pltpu


def _round_up(n, m):
    return ((n + m - 1) // m) * m


def _finetune_kernel(x_ref, we_ref, be_ref, wc_ref, bc_ref, out_ref, *, inv_hw):
    # x_ref : (B_TILE, C, HW)   f32   (HW on the lane axis)
    # we_ref: (C, F_pad)        bf16
    # be_ref: (1, F_pad)        f32
    # wc_ref: (F_pad, NC_pad)   bf16
    # bc_ref: (1, NC_pad)       f32
    # out   : (B_TILE, NC_pad)  f32   (lane-dense, NC_pad % 128 == 0)

    # Global average pool in f32 (XLU lane reduce) -> matches torch mean numerics.
    pooled = jnp.sum(x_ref[...], axis=-1) * inv_hw            # (B_TILE, C) f32

    # Encoder Linear + ReLU: bf16 MXU matmul, f32 accumulate.
    feat = jnp.dot(pooled.astype(we_ref.dtype), we_ref[...],
                   preferred_element_type=jnp.float32)
    feat = jnp.maximum(feat + be_ref[...], 0.0)

    # Classifier head: Linear + Sigmoid.
    logits = jnp.dot(feat.astype(wc_ref.dtype), wc_ref[...],
                     preferred_element_type=jnp.float32)
    out_ref[...] = jax.nn.sigmoid(logits + bc_ref[...])


def _vmem_budget_bytes():
    try:
        cap = int(pltpu.get_tpu_info().vmem_capacity_bytes)
    except Exception:
        cap = 64 << 20                 # v7x per-TC VMEM: smallest of the fleet
    # Leave roughly half of physical VMEM for compiler scratch / headroom.
    return max(cap // 2, 16 << 20)


def _plan_tiling(B, C, HW, F_pad, NC_pad):
    budget = _vmem_budget_bytes()
    c_pad = _round_up(C, 8)            # f32 sublane padding of the x block

    # Constant parameter blocks, resident across the whole grid.
    param_bytes = (c_pad * F_pad * 2            # w_enc  bf16
                   + F_pad * NC_pad * 2         # w_cls  bf16
                   + F_pad * 4 + NC_pad * 4)    # biases f32

    def footprint(bt, param_buffers=2):         # conservative: double-buffered params
        x_blk = bt * c_pad * HW * 4             # f32 input block
        out_blk = bt * NC_pad * 4               # f32 output block
        return 2 * x_blk + 2 * out_blk + param_buffers * param_bytes

    # Largest batch tile that fits the VMEM budget (multiples of 16 for bf16
    # sublane packing of the matmul operands).
    b_tile = 16
    for cand in (512, 256, 128, 64, 32, 16):
        if footprint(cand) <= budget:
            b_tile = cand
            break

    if B <= 16:
        # Tiny batch: one block covering the whole batch (block dims equal to
        # the full array dims are always layout-legal; nothing to split).
        b_tile = B
    else:
        b_tile = min(b_tile, _round_up(B, 16))
        # Keep >= 2 grid steps when B allows it, so ("parallel",) actually
        # shards across both v7x TensorCores and the x DMA overlaps compute.
        while b_tile > 16 and pl.cdiv(B, b_tile) < 2:
            b_tile //= 2

    fp = footprint(b_tile)
    vmem_limit = int(max(min(budget, 2 * fp), fp + (2 << 20), 16 << 20))
    return b_tile, vmem_limit


def _build_forward(B, C, HW, F_pad, NC_pad, b_tile, vmem_limit, inv_hw,
                   single_buffer_params):
    kernel = functools.partial(_finetune_kernel, inv_hw=inv_hw)
    pm = {"pipeline_mode": pl.Buffered(1)} if single_buffer_params else {}
    in_specs = [
        # x advances with the grid; parameters stay resident in VMEM.
        pl.BlockSpec((b_tile, C, HW), lambda i: (i, 0, 0)),
        pl.BlockSpec((C, F_pad), lambda i: (0, 0), **pm),
        pl.BlockSpec((1, F_pad), lambda i: (0, 0), **pm),
        pl.BlockSpec((F_pad, NC_pad), lambda i: (0, 0), **pm),
        pl.BlockSpec((1, NC_pad), lambda i: (0, 0), **pm),
    ]
    return pl.pallas_call(
        kernel,
        out_shape=jax.ShapeDtypeStruct((B, NC_pad), jnp.float32),
        grid_spec=pltpu.PrefetchScalarGridSpec(
            num_scalar_prefetch=0,
            grid=(pl.cdiv(B, b_tile),),
            in_specs=in_specs,
            out_specs=pl.BlockSpec((b_tile, NC_pad), lambda i: (i, 0)),
        ),
        compiler_params=pltpu.CompilerParams(
            dimension_semantics=("parallel",),   # 2 TCs on v7x; no-op on v5e/v6e
            vmem_limit_bytes=vmem_limit,
        ),
    )


def finetune_sim_siam_forward(x_nchw, w_enc, b_enc, w_cls, b_cls):
    """x_nchw: (B, C, H, W) float32. Returns (B, num_classes) float32."""
    B, C, H, W = x_nchw.shape
    HW = H * W
    F = w_enc.shape[1]            # encoder out_features
    NC = w_cls.shape[1]           # num_classes

    F_pad = _round_up(F, 128)
    NC_pad = _round_up(NC, 128)

    # Parameter packing (lane-dense pads + bf16 cast of the weight matrices).
    # In a real serving loop these would be precomputed once at model init.
    w_enc_p = jnp.pad(w_enc, ((0, 0), (0, F_pad - F))).astype(jnp.bfloat16)
    b_enc_p = jnp.pad(b_enc, (0, F_pad - F)).reshape(1, F_pad).astype(jnp.float32)
    w_cls_p = jnp.pad(w_cls, ((0, F_pad - F), (0, NC_pad - NC))).astype(jnp.bfloat16)
    b_cls_p = jnp.pad(b_cls, (0, NC_pad - NC)).reshape(1, NC_pad).astype(jnp.float32)

    # x stays f32; reshape to (B, C, H*W) is a free view (no extra HBM pass).
    x3 = x_nchw.reshape(B, C, HW)

    b_tile, vmem_limit = _plan_tiling(B, C, HW, F_pad, NC_pad)
    args = (x3, w_enc_p, b_enc_p, w_cls_p, b_cls_p)
    try:
        out = _build_forward(B, C, HW, F_pad, NC_pad, b_tile, vmem_limit,
                             1.0 / HW, single_buffer_params=True)(*args)
    except Exception:
        # Fallback if this Pallas version rejects pl.Buffered(1) on inputs.
        out = _build_forward(B, C, HW, F_pad, NC_pad, b_tile, vmem_limit,
                             1.0 / HW, single_buffer_params=False)(*args)
    return out[:, :NC]


def _reference_forward(x_nchw, w_enc, b_enc, w_cls, b_cls):
    pooled = jnp.mean(x_nchw, axis=(2, 3))
    feat = jnp.maximum(pooled @ w_enc + b_enc, 0.0)
    return jax.nn.sigmoid(feat @ w_cls + b_cls)


if __name__ == "__main__":
    # Small shapes consistent with the module's forward (NCHW like PyTorch):
    B, C, H, W = 2, 4, 16, 16
    IN_FEATURES = 32              # encoder.out_features
    NUM_CLASSES = 10

    key = jax.random.PRNGKey(0)
    kx, k1, k2, k3, k4 = jax.random.split(key, 5)

    x = jax.random.normal(kx, (B, C, H, W), dtype=jnp.float32)

    # Deterministic synthetic parameters (no checkpoint loading).
    w_enc = jax.random.normal(k1, (C, IN_FEATURES), dtype=jnp.float32) * 0.1
    b_enc = jax.random.normal(k2, (IN_FEATURES,), dtype=jnp.float32) * 0.1
    w_cls = jax.random.normal(k3, (IN_FEATURES, NUM_CLASSES), dtype=jnp.float32) * 0.1
    b_cls = jax.random.normal(k4, (NUM_CLASSES,), dtype=jnp.float32) * 0.1

    out = finetune_sim_siam_forward(x, w_enc, b_enc, w_cls, b_cls)
    out = jax.block_until_ready(out)

    ref = _reference_forward(x, w_enc, b_enc, w_cls, b_cls)
    assert out.shape == (B, NUM_CLASSES)
    # f32 GAP + bf16 MXU matmuls (f32 accumulate) vs f32 reference.
    assert jnp.allclose(out, ref, atol=1e-2, rtol=1e-2), \
        f"max abs err {jnp.max(jnp.abs(out - ref))}"

    print("KERNEL_OK")
</pallas_src>

<mosaic_0001>
module attributes {stable_mosaic.version = 11 : i64} {
  func.func @_finetune_kernel(%arg0: i32, %arg1: memref<2x4x256xf32, #tpu.memory_space<vmem>>, %arg2: memref<4x128xbf16, #tpu.memory_space<vmem>>, %arg3: memref<1x128xf32, #tpu.memory_space<vmem>>, %arg4: memref<128x128xbf16, #tpu.memory_space<vmem>>, %arg5: memref<1x128xf32, #tpu.memory_space<vmem>>, %arg6: memref<2x128xf32, #tpu.memory_space<vmem>>) attributes {dimension_semantics = [#tpu.dimension_semantics<parallel>], iteration_bounds = array<i64: 1>, scalar_prefetch = 0 : i64, scratch_operands = 0 : i64, tpu.core_type = #tpu.core_type<tc>, window_params = [{transform_indices = @transform_0, window_bounds = array<i64: 2, 4, 256>}, {pipeline_mode = #tpu.pipeline_mode<synchronous>, transform_indices = @transform_1, window_bounds = array<i64: 4, 128>}, {pipeline_mode = #tpu.pipeline_mode<synchronous>, transform_indices = @transform_2, window_bounds = array<i64: 1, 128>}, {pipeline_mode = #tpu.pipeline_mode<synchronous>, transform_indices = @transform_3, window_bounds = array<i64: 128, 128>}, {pipeline_mode = #tpu.pipeline_mode<synchronous>, transform_indices = @transform_4, window_bounds = array<i64: 1, 128>}, {transform_indices = @transform_5, window_bounds = array<i64: 2, 128>}]} {
    %c0 = arith.constant 0 : index
    %c0_0 = arith.constant 0 : index
    %c0_1 = arith.constant 0 : index
    %0 = vector.load %arg1[%c0, %c0_0, %c0_1] : memref<2x4x256xf32, #tpu.memory_space<vmem>>, vector<2x4x256xf32>
    %cst = arith.constant dense<0.000000e+00> : vector<2x4xf32>
    %1 = vector.multi_reduction <add>, %0, %cst [2] : vector<2x4x256xf32> to vector<2x4xf32>
    %cst_2 = arith.constant 3.906250e-03 : f32
    %2 = vector.broadcast %cst_2 : f32 to vector<2x4xf32>
    %3 = arith.mulf %1, %2 : vector<2x4xf32>
    %4 = arith.truncf %3 : vector<2x4xf32> to vector<2x4xbf16>
    %c0_3 = arith.constant 0 : index
    %c0_4 = arith.constant 0 : index
    %5 = vector.load %arg2[%c0_3, %c0_4] : memref<4x128xbf16, #tpu.memory_space<vmem>>, vector<4x128xbf16>
    %cst_5 = arith.constant dense<0.000000e+00> : vector<2x128xf32>
    %6 = tpu.matmul %4, %5, %cst_5 {dimension_numbers = #tpu.dot_dimension_numbers<[1], [0], [0], [1], [0, 0, 1, 1], [], []>} : vector<2x4xbf16>, vector<4x128xbf16>, vector<2x128xf32> -> vector<2x128xf32>
    %c0_6 = arith.constant 0 : index
    %c0_7 = arith.constant 0 : index
    %7 = vector.load %arg3[%c0_6, %c0_7] : memref<1x128xf32, #tpu.memory_space<vmem>>, vector<1x128xf32>
    %8 = vector.broadcast %7 : vector<1x128xf32> to vector<2x128xf32>
    %9 = arith.addf %6, %8 : vector<2x128xf32>
    %cst_8 = arith.constant 0.000000e+00 : f32
    %10 = vector.broadcast %cst_8 : f32 to vector<2x128xf32>
    %11 = arith.maximumf %9, %10 : vector<2x128xf32>
    %12 = arith.truncf %11 : vector<2x128xf32> to vector<2x128xbf16>
    %c0_9 = arith.constant 0 : index
    %c0_10 = arith.constant 0 : index
    %13 = vector.load %arg4[%c0_9, %c0_10] : memref<128x128xbf16, #tpu.memory_space<vmem>>, vector<128x128xbf16>
    %cst_11 = arith.constant dense<0.000000e+00> : vector<2x128xf32>
    %14 = tpu.matmul %12, %13, %cst_11 {dimension_numbers = #tpu.dot_dimension_numbers<[1], [0], [0], [1], [0, 0, 1, 1], [], []>} : vector<2x128xbf16>, vector<128x128xbf16>, vector<2x128xf32> -> vector<2x128xf32>
    %c0_12 = arith.constant 0 : index
    %c0_13 = arith.constant 0 : index
    %15 = vector.load %arg5[%c0_12, %c0_13] : memref<1x128xf32, #tpu.memory_space<vmem>>, vector<1x128xf32>
    %16 = vector.broadcast %15 : vector<1x128xf32> to vector<2x128xf32>
    %17 = arith.addf %14, %16 : vector<2x128xf32>
    %18 = arith.negf %17 : vector<2x128xf32>
    %19 = math.exp %18 : vector<2x128xf32>
    %cst_14 = arith.constant 1.000000e+00 : f32
    %20 = vector.broadcast %cst_14 : f32 to vector<2x128xf32>
    %21 = arith.addf %20, %19 : vector<2x128xf32>
    %22 = arith.divf %20, %21 : vector<2x128xf32>
    %c0_15 = arith.constant 0 : index
    %c0_16 = arith.constant 0 : index
    %23 = vector.load %arg6[%c0_15, %c0_16] : memref<2x128xf32, #tpu.memory_space<vmem>>, vector<2x128xf32>
    tpu.vector_store %arg6[%c0_15, %c0_16], %22 {strides = array<i32>} : memref<2x128xf32, #tpu.memory_space<vmem>>, vector<2x128xf32>,
    return
  }
  func.func @transform_0(%arg0: i32) -> (i32, i32, i32) {
    %c0_i32 = arith.constant 0 : i32
    %c0_i32_0 = arith.constant 0 : i32
    %c0_i32_1 = arith.constant 0 : i32
    return %arg0, %c0_i32, %c0_i32_0 : i32, i32, i32
  }
  func.func @transform_1(%arg0: i32) -> (i32, i32) {
    %c0_i32 = arith.constant 0 : i32
    %c0_i32_0 = arith.constant 0 : i32
    %c0_i32_1 = arith.constant 0 : i32
    return %c0_i32, %c0_i32_0 : i32, i32
  }
  func.func @transform_2(%arg0: i32) -> (i32, i32) {
    %c0_i32 = arith.constant 0 : i32
    %c0_i32_0 = arith.constant 0 : i32
    %c0_i32_1 = arith.constant 0 : i32
    return %c0_i32, %c0_i32_0 : i32, i32
  }
  func.func @transform_3(%arg0: i32) -> (i32, i32) {
    %c0_i32 = arith.constant 0 : i32
    %c0_i32_0 = arith.constant 0 : i32
    %c0_i32_1 = arith.constant 0 : i32
    return %c0_i32, %c0_i32_0 : i32, i32
  }
  func.func @transform_4(%arg0: i32) -> (i32, i32) {
    %c0_i32 = arith.constant 0 : i32
    %c0_i32_0 = arith.constant 0 : i32
    %c0_i32_1 = arith.constant 0 : i32
    return %c0_i32, %c0_i32_0 : i32, i32
  }
  func.func @transform_5(%arg0: i32) -> (i32, i32) {
    %c0_i32 = arith.constant 0 : i32
    %c0_i32_0 = arith.constant 0 : i32
    return %arg0, %c0_i32 : i32, i32
  }
}

module attributes {stable_mosaic.version = 11 : i64} {
  func.func @_finetune_kernel(%arg0: i32, %arg1: memref<2x4x256xf32, #tpu.memory_space<vmem>>, %arg2: memref<4x128xbf16, #tpu.memory_space<vmem>>, %arg3: memref<1x128xf32, #tpu.memory_space<vmem>>, %arg4: memref<128x128xbf16, #tpu.memory_space<vmem>>, %arg5: memref<1x128xf32, #tpu.memory_space<vmem>>, %arg6: memref<2x128xf32, #tpu.memory_space<vmem>>) attributes {dimension_semantics = [#tpu.dimension_semantics<parallel>], iteration_bounds = array<i64: 1>, scalar_prefetch = 0 : i64, scratch_operands = 0 : i64, tpu.core_type = #tpu.core_type<tc>, window_params = [{transform_indices = @transform_0, window_bounds = array<i64: 2, 4, 256>}, {pipeline_mode = #tpu.pipeline_mode<synchronous>, transform_indices = @transform_1, window_bounds = array<i64: 4, 128>}, {pipeline_mode = #tpu.pipeline_mode<synchronous>, transform_indices = @transform_2, window_bounds = array<i64: 1, 128>}, {pipeline_mode = #tpu.pipeline_mode<synchronous>, transform_indices = @transform_3, window_bounds = array<i64: 128, 128>}, {pipeline_mode = #tpu.pipeline_mode<synchronous>, transform_indices = @transform_4, window_bounds = array<i64: 1, 128>}, {transform_indices = @transform_5, window_bounds = array<i64: 2, 128>}]} {
    %c0 = arith.constant 0 : index
    %c0_0 = arith.constant 0 : index
    %c0_1 = arith.constant 0 : index
    %0 = vector.load %arg1[%c0, %c0_0, %c0_1] : memref<2x4x256xf32, #tpu.memory_space<vmem>>, vector<2x4x256xf32>
    %cst = arith.constant dense<0.000000e+00> : vector<2x4xf32>
    %1 = vector.multi_reduction <add>, %0, %cst [2] : vector<2x4x256xf32> to vector<2x4xf32>
    %cst_2 = arith.constant 3.906250e-03 : f32
    %2 = vector.broadcast %cst_2 : f32 to vector<2x4xf32>
    %3 = arith.mulf %1, %2 : vector<2x4xf32>
    %4 = arith.truncf %3 : vector<2x4xf32> to vector<2x4xbf16>
    %c0_3 = arith.constant 0 : index
    %c0_4 = arith.constant 0 : index
    %5 = vector.load %arg2[%c0_3, %c0_4] : memref<4x128xbf16, #tpu.memory_space<vmem>>, vector<4x128xbf16>
    %cst_5 = arith.constant dense<0.000000e+00> : vector<2x128xf32>
    %6 = tpu.matmul %4, %5, %cst_5 {dimension_numbers = #tpu.dot_dimension_numbers<[1], [0], [0], [1], [0, 0, 1, 1], [], []>} : vector<2x4xbf16>, vector<4x128xbf16>, vector<2x128xf32> -> vector<2x128xf32>
    %c0_6 = arith.constant 0 : index
    %c0_7 = arith.constant 0 : index
    %7 = vector.load %arg3[%c0_6, %c0_7] : memref<1x128xf32, #tpu.memory_space<vmem>>, vector<1x128xf32>
    %8 = vector.broadcast %7 : vector<1x128xf32> to vector<2x128xf32>
    %9 = arith.addf %6, %8 : vector<2x128xf32>
    %cst_8 = arith.constant 0.000000e+00 : f32
    %10 = vector.broadcast %cst_8 : f32 to vector<2x128xf32>
    %11 = arith.maximumf %9, %10 : vector<2x128xf32>
    %12 = arith.truncf %11 : vector<2x128xf32> to vector<2x128xbf16>
    %c0_9 = arith.constant 0 : index
    %c0_10 = arith.constant 0 : index
    %13 = vector.load %arg4[%c0_9, %c0_10] : memref<128x128xbf16, #tpu.memory_space<vmem>>, vector<128x128xbf16>
    %cst_11 = arith.constant dense<0.000000e+00> : vector<2x128xf32>
    %14 = tpu.matmul %12, %13, %cst_11 {dimension_numbers = #tpu.dot_dimension_numbers<[1], [0], [0], [1], [0, 0, 1, 1], [], []>} : vector<2x128xbf16>, vector<128x128xbf16>, vector<2x128xf32> -> vector<2x128xf32>
    %c0_12 = arith.constant 0 : index
    %c0_13 = arith.constant 0 : index
    %15 = vector.load %arg5[%c0_12, %c0_13] : memref<1x128xf32, #tpu.memory_space<vmem>>, vector<1x128xf32>
    %16 = vector.broadcast %15 : vector<1x128xf32> to vector<2x128xf32>
    %17 = arith.addf %14, %16 : vector<2x128xf32>
    %18 = arith.negf %17 : vector<2x128xf32>
    %19 = math.exp %18 : vector<2x128xf32>
    %cst_14 = arith.constant 1.000000e+00 : f32
    %20 = vector.broadcast %cst_14 : f32 to vector<2x128xf32>
    %21 = arith.addf %20, %19 : vector<2x128xf32>
    %22 = arith.divf %20, %21 : vector<2x128xf32>
    %c0_15 = arith.constant 0 : index
    %c0_16 = arith.constant 0 : index
    %23 = vector.load %arg6[%c0_15, %c0_16] : memref<2x128xf32, #tpu.memory_space<vmem>>, vector<2x128xf32>
    tpu.vector_store %arg6[%c0_15, %c0_16], %22 {strides = array<i32>} : memref<2x128xf32, #tpu.memory_space<vmem>>, vector<2x128xf32>,
    return
  }
  func.func @transform_0(%arg0: i32) -> (i32, i32, i32) {
    %c0_i32 = arith.constant 0 : i32
    %c0_i32_0 = arith.constant 0 : i32
    %c0_i32_1 = arith.constant 0 : i32
    return %arg0, %c0_i32, %c0_i32_0 : i32, i32, i32
  }
  func.func @transform_1(%arg0: i32) -> (i32, i32) {
    %c0_i32 = arith.constant 0 : i32
    %c0_i32_0 = arith.constant 0 : i32
    %c0_i32_1 = arith.constant 0 : i32
    return %c0_i32, %c0_i32_0 : i32, i32
  }
  func.func @transform_2(%arg0: i32) -> (i32, i32) {
    %c0_i32 = arith.constant 0 : i32
    %c0_i32_0 = arith.constant 0 : i32
    %c0_i32_1 = arith.constant 0 : i32
    return %c0_i32, %c0_i32_0 : i32, i32
  }
  func.func @transform_3(%arg0: i32) -> (i32, i32) {
    %c0_i32 = arith.constant 0 : i32
    %c0_i32_0 = arith.constant 0 : i32
    %c0_i32_1 = arith.constant 0 : i32
    return %c0_i32, %c0_i32_0 : i32, i32
  }
  func.func @transform_4(%arg0: i32) -> (i32, i32) {
    %c0_i32 = arith.constant 0 : i32
    %c0_i32_0 = arith.constant 0 : i32
    %c0_i32_1 = arith.constant 0 : i32
    return %c0_i32, %c0_i32_0 : i32, i32
  }
  func.func @transform_5(%arg0: i32) -> (i32, i32) {
    %c0_i32 = arith.constant 0 : i32
    %c0_i32_0 = arith.constant 0 : i32
    return %arg0, %c0_i32 : i32, i32
  }
}

</mosaic_0001>

<llo_original>
// kernel: tpu_custom_call.1
$region0: #{tpu_custom_call.1}
  #allocation0 [shape = 'u32[]', space=smem, size = 0x4, offset = 0x4, fixed_abs, tag = 'smem constant byte address 0x4 - core index']
  #allocation1 [shape = 'u32[144,128]{1,0:T(1,128)}', space=vmem, size = 0x12000, scoped, tag = 'internal scratch']
  %s0 = inlined_call_operand.hbm [shape: f32[2,4,256], index: 0, kind: input, shape index: {}]
  %s1 = inlined_call_operand.hbm [shape: bf16[4,128], index: 1, kind: input, shape index: {}]
  %s2 = inlined_call_operand.vmem [shape: f32[1,128], index: 2, kind: input, shape index: {}]
  %s3 = inlined_call_operand.hbm [shape: bf16[128,128], index: 3, kind: input, shape index: {}]
  %s4 = inlined_call_operand.vmem [shape: f32[1,128], index: 4, kind: input, shape index: {}]
  %s5 = inlined_call_operand.hbm [shape: f32[2,128], index: 5, kind: output, shape index: {}]
  %s6 = sld [smem:[#allocation0]]
  $region42: #{tpu_custom_call.1} parent=0
    _
  %s8 = ssub.s32 1, %s6
  %s9 = scalar_select 0, %s8, %s6
  $region1: #{tpu_custom_call.1} parent=0
    #allocation2 [shape = 'u8[8192]{0}', space=vmem, size = 0x2000, scoped, tag = 'input window, operand 0, single buffered']
    #allocation3 [shape = 's32[1]{0}', space=sflag, size = 0x4, scoped, tag = 'scoped memory for tpu_custom_call.1']
    #allocation4 [shape = 's32[1]{0}', space=sflag, size = 0x4, scoped, tag = 'scoped memory for tpu_custom_call.1']
    #allocation5 [shape = 'u8[1024]{0}', space=vmem, size = 0x400, scoped, tag = 'input window, operand 1, single buffered']
    #allocation6 [shape = 's32[1]{0}', space=sflag, size = 0x4, scoped, tag = 'scoped memory for tpu_custom_call.1']
    #allocation7 [shape = 'u8[32768]{0}', space=vmem, size = 0x8000, scoped, tag = 'input window, operand 3, single buffered']
    #allocation8 [shape = 'u8[1024]{0}', space=vmem, size = 0x400, scoped, tag = 'output window, operand 0, single buffered']
    %10 = vsyncpa [#allocation3], 0
    %11 = vsyncpa [#allocation6], 0
    %12 = vsyncpa [#allocation4], 0
    // Predicated region
    $region2: #{tpu_custom_call.1} parent=1 // pred_check
      _
    $region3: #{tpu_custom_call.1} parent=1 // pred_check_branch
      %14 = sbr.rel (0) target = $region5
    $region4: #{tpu_custom_call.1} parent=1 // pred_region
      %s16 = ssub.s32 256, 256
      %17 = vsyncadd [#allocation3], %s16
      %s18 = sshll.u32 [#allocation2], 4
      %s19 = int_to_ptr.vmem [resolvable:$true] %s18
      %24 = dma.hbm_to_vmem [thread:$0]  %s0, 256, %s19, [#allocation3], 128, 128, 8
    $region5: #{tpu_custom_call.1} parent=1 // pred_fallthru
      _
    // Predicated region
    $region6: #{tpu_custom_call.1} parent=1 // pred_check
      _
    $region7: #{tpu_custom_call.1} parent=1 // pred_check_branch
      %26 = sbr.rel (0) target = $region9
    $region8: #{tpu_custom_call.1} parent=1 // pred_region
      %s28 = ssub.s32 32, 32
      %29 = vsyncadd [#allocation6], %s28
      %s31 = sshll.u32 [#allocation5], 4
      %s32 = int_to_ptr.vmem [resolvable:$true] %s31
      %34 = dma.hbm_to_vmem [thread:$0]  %s1, 32, %s32, [#allocation6]
    $region9: #{tpu_custom_call.1} parent=1 // pred_fallthru
      _
    // Predicated region
    $region10: #{tpu_custom_call.1} parent=1 // pred_check
      _
    $region11: #{tpu_custom_call.1} parent=1 // pred_check_branch
      %36 = sbr.rel (0) target = $region13
    $region12: #{tpu_custom_call.1} parent=1 // pred_region
      _
    $region13: #{tpu_custom_call.1} parent=1 // pred_fallthru
      _
    // Predicated region
    $region14: #{tpu_custom_call.1} parent=1 // pred_check
      _
    $region15: #{tpu_custom_call.1} parent=1 // pred_check_branch
      %38 = sbr.rel (0) target = $region17
    $region16: #{tpu_custom_call.1} parent=1 // pred_region
      %s40 = ssub.s32 1024, 1024
      %41 = vsyncadd [#allocation6], %s40
      %s42 = sshll.u32 [#allocation7], 4
      %s43 = int_to_ptr.vmem [resolvable:$true] %s42
      %48 = dma.hbm_to_vmem [thread:$0]  %s3, 1024, %s43, [#allocation6], 64, 64, 4
    $region17: #{tpu_custom_call.1} parent=1 // pred_fallthru
      _
    // Predicated region
    $region18: #{tpu_custom_call.1} parent=1 // pred_check
      _
    $region19: #{tpu_custom_call.1} parent=1 // pred_check_branch
      %50 = sbr.rel (0) target = $region21
    $region20: #{tpu_custom_call.1} parent=1 // pred_region
      _
    $region21: #{tpu_custom_call.1} parent=1 // pred_fallthru
      _
    // Predicated region
    $region22: #{tpu_custom_call.1} parent=1 // pred_check
      _
    $region23: #{tpu_custom_call.1} parent=1 // pred_check_branch
      %52 = sbr.rel (0) target = $region25
    $region24: #{tpu_custom_call.1} parent=1 // pred_region
      %53 = dma.done [#allocation3], 256
    $region25: #{tpu_custom_call.1} parent=1 // pred_fallthru
      _
    // Predicated region
    $region26: #{tpu_custom_call.1} parent=1 // pred_check
      _
    $region27: #{tpu_custom_call.1} parent=1 // pred_check_branch
      %55 = sbr.rel (0) target = $region29
    $region28: #{tpu_custom_call.1} parent=1 // pred_region
      %56 = dma.done [#allocation6], 32
    $region29: #{tpu_custom_call.1} parent=1 // pred_fallthru
      _
    // Predicated region
    $region30: #{tpu_custom_call.1} parent=1 // pred_check
      _
    $region31: #{tpu_custom_call.1} parent=1 // pred_check_branch
      %58 = sbr.rel (0) target = $region33
    $region32: #{tpu_custom_call.1} parent=1 // pred_region
      %59 = dma.done [#allocation6], 1024
    $region33: #{tpu_custom_call.1} parent=1 // pred_fallthru
      _
    %v61 = vld [vmem:[#allocation2] sm:$0xff]
    %v62 = vld [vmem:[#allocation2 + $0x8] sm:$0xff]
    %v65 = vcombine.high %v61, %v61
    %v66 = vcombine.high %v62, %v62
    %vm69 = vcmask 1043456
    %v70 = vsel %vm69, %v61, 0.0
    %v71 = vsel %vm69, %v65, 0.0
    %v72 = vadd.f32 %v70, %v71
    %73 = vadd.xlane.f32.xlu0 %v72
    %v74 = vpop.xlane.xlu0 %73
    %v75 = vsel %vm69, %v62, 0.0
    %v76 = vsel %vm69, %v66, 0.0
    %v77 = vadd.f32 %v75, %v76
    %78 = vadd.xlane.f32.xlu0 %v77
    %v79 = vpop.xlane.xlu0 %78
    %v80 = vmul.f32 %v74, 0.00390625
    %v81 = vmul.f32 %v79, 0.00390625
    %v82 = vpack.c.bf16 %v80, %v80
    %v83 = vpack.c.bf16 %v81, %v81
    %v84 = vld [vmem:[#allocation5] sm:$0x3]
    %v85 = vld [vmem:[%s2] sm:$0x1]
    %v87 = vlaneseq
    %v88 = vshrl.u32 %v87, 7
    %v89 = vsub.s32 0, %v88
    %v90 = vrot.slane %v85, %v89
    %v94 = vunpack.c.l.b16 %v82
    %v95 = vunpack.c.l.b16 %v83
    %v96 = vlaneseq
    %v97 = vand.u32 %v96, 127
    %v98 = vlaneseq
    %v99 = vshrl.u32 %v98, 7
    %v100 = vsub.s32 %v97, %v99
    %v101 = vrot.slane %v94, %v100
    %v102 = vlaneseq
    %v103 = vshrl.u32 %v102, 7
    %v104 = vsub.s32 %v97, %v103
    %v105 = vrot.slane %v95, %v104
    %vm106 = vcmask 1041409
    %v107 = vsel %vm106, %v105, %v101
    %v108 = vpack.c.b16 %v107, %v107
    %vm109 = vcmask 31744
    %v111 = vsel %vm109, %v108, 0
    %vm113 = vcmask 1041408
    %v115 = vsel %vm113, %v84, 0
    %117 = vmatprep.subr.bf16.mxu0 0
    %118 = vmatpush1.bf16.msra.mxu0 0
    %119 = vmatprep.subr.bf16.mxu0 0
    %120 = vmatpush1.bf16.msra.mxu0 0
    %121 = vmatprep.subr.bf16.mxu0 0
    %122 = vmatpush1.bf16.msra.mxu0 0
    %123 = vmatprep.subr.bf16.mxu0 0
    %124 = vmatpush1.bf16.msra.mxu0 0
    %125 = vmatprep.subr.bf16.mxu0 0
    %126 = vmatpush1.bf16.msra.mxu0 0
    %127 = vmatprep.subr.bf16.mxu0 0
    %128 = vmatpush1.bf16.msra.mxu0 0
    %129 = vmatprep.subr.bf16.mxu0 0
    %130 = vmatpush1.bf16.msra.mxu0 0
    %131 = vmatprep.subr.bf16.mxu0 0
    %132 = vmatpush1.bf16.msra.mxu0 %v115
    %133 = vmatprep.subr.bf16.mxu0 0
    %134 = vmatpush2.bf16.msra.mxu0 0
    %135 = vmatprep.subr.bf16.mxu0 0
    %136 = vmatpush2.bf16.msra.mxu0 0
    %137 = vmatprep.subr.bf16.mxu0 0
    %138 = vmatpush2.bf16.msra.mxu0 0
    %139 = vmatprep.subr.bf16.mxu0 0
    %140 = vmatpush2.bf16.msra.mxu0 0
    %141 = vmatprep.subr.bf16.mxu0 0
    %142 = vmatpush2.bf16.msra.mxu0 0
    %143 = vmatprep.subr.bf16.mxu0 0
    %144 = vmatpush2.bf16.msra.mxu0 0
    %145 = vmatprep.subr.bf16.mxu0 0
    %146 = vmatpush2.bf16.msra.mxu0 0
    %147 = vmatprep.subr.bf16.mxu0 0
    %148 = vmatpush2.bf16.msra.mxu0 0
    %149 = vmatprep.mubr.bf16.mxu0 0
    %150 = vmatmul.mubr.bf16.gmra.mxu0 %v111
    %v151 = vpop.f32.mrf.mxu0
    %v152 = vadd.f32 %v90, %v151
    %v153 = vpop.f32.mrf.mxu0
    %v154 = vpop.f32.mrf.mxu0
    %v155 = vpop.f32.mrf.mxu0
    %156 = vdwg.mxu0
    %v157 = vmax.f32 %v152, 0.0
    %v158 = vpack.c.bf16 %v157, %v157
    %v159 = vld [vmem:[#allocation7] sm:$0xf]
    %v160 = vld [vmem:[#allocation7 + $0x4] sm:$0xf]
    %v161 = vld [vmem:[#allocation7 + $0x8] sm:$0xf]
    %v162 = vld [vmem:[#allocation7 + $0xc] sm:$0xf]
    %v163 = vld [vmem:[#allocation7 + $0x10] sm:$0xf]
    %v164 = vld [vmem:[#allocation7 + $0x14] sm:$0xf]
    %v165 = vld [vmem:[#allocation7 + $0x18] sm:$0xf]
    %v166 = vld [vmem:[#allocation7 + $0x1c] sm:$0xf]
    %v167 = vld [vmem:[#allocation7 + $0x20] sm:$0xf]
    %v168 = vld [vmem:[#allocation7 + $0x24] sm:$0xf]
    %v169 = vld [vmem:[#allocation7 + $0x28] sm:$0xf]
    %v170 = vld [vmem:[#allocation7 + $0x2c] sm:$0xf]
    %v171 = vld [vmem:[#allocation7 + $0x30] sm:$0xf]
    %v172 = vld [vmem:[#allocation7 + $0x34] sm:$0xf]
    %v173 = vld [vmem:[#allocation7 + $0x38] sm:$0xf]
    %v174 = vld [vmem:[#allocation7 + $0x3c] sm:$0xf]
    %v175 = vld [vmem:[%s4] sm:$0x1]
    %v177 = vlaneseq
    %v178 = vshrl.u32 %v177, 7
    %v179 = vsub.s32 0, %v178
    %v180 = vrot.slane %v175, %v179
    %v198 = vunpack.c.l.b16 %v159
    %v199 = vunpack.c.l.b16 %v160
    %v200 = vunpack.c.l.b16 %v161
    %v201 = vunpack.c.l.b16 %v162
    %v202 = vunpack.c.l.b16 %v163
    %v203 = vunpack.c.l.b16 %v164
    %v204 = vunpack.c.l.b16 %v165
    %v205 = vunpack.c.l.b16 %v166
    %v206 = vunpack.c.l.b16 %v167
    %v207 = vunpack.c.l.b16 %v168
    %v208 = vunpack.c.l.b16 %v169
    %v209 = vunpack.c.l.b16 %v170
    %v210 = vunpack.c.l.b16 %v171
    %v211 = vunpack.c.l.b16 %v172
    %v212 = vunpack.c.l.b16 %v173
    %v213 = vunpack.c.l.b16 %v174
    %v214 = vpack.c.b16 %v199, %v198
    %v215 = vpack.c.b16 %v201, %v200
    %v216 = vpack.c.b16 %v203, %v202
    %v217 = vpack.c.b16 %v205, %v204
    %v218 = vpack.c.b16 %v207, %v206
    %v219 = vpack.c.b16 %v209, %v208
    %v220 = vpack.c.b16 %v211, %v210
    %v221 = vpack.c.b16 %v213, %v212
    %230 = vmatprep.subr.bf16.mxu0 0
    %231 = vmatpush1.bf16.msra.mxu0 %v221
    %232 = vmatprep.subr.bf16.mxu0 0
    %233 = vmatpush1.bf16.msra.mxu0 %v220
    %234 = vmatprep.subr.bf16.mxu0 0
    %235 = vmatpush1.bf16.msra.mxu0 %v219
    %236 = vmatprep.subr.bf16.mxu0 0
    %237 = vmatpush1.bf16.msra.mxu0 %v218
    %238 = vmatprep.subr.bf16.mxu0 0
    %239 = vmatpush1.bf16.msra.mxu0 %v217
    %240 = vmatprep.subr.bf16.mxu0 0
    %241 = vmatpush1.bf16.msra.mxu0 %v216
    %242 = vmatprep.subr.bf16.mxu0 0
    %243 = vmatpush1.bf16.msra.mxu0 %v215
    %244 = vmatprep.subr.bf16.mxu0 0
    %245 = vmatpush1.bf16.msra.mxu0 %v214
    %246 = vmatprep.subr.bf16.mxu0 0
    %247 = vmatpush2.bf16.msra.mxu0 0
    %248 = vmatprep.subr.bf16.mxu0 0
    %249 = vmatpush2.bf16.msra.mxu0 0
    %250 = vmatprep.subr.bf16.mxu0 0
    %251 = vmatpush2.bf16.msra.mxu0 0
    %252 = vmatprep.subr.bf16.mxu0 0
    %253 = vmatpush2.bf16.msra.mxu0 0
    %254 = vmatprep.subr.bf16.mxu0 0
    %255 = vmatpush2.bf16.msra.mxu0 0
    %256 = vmatprep.subr.bf16.mxu0 0
    %257 = vmatpush2.bf16.msra.mxu0 0
    %258 = vmatprep.subr.bf16.mxu0 0
    %259 = vmatpush2.bf16.msra.mxu0 0
    %260 = vmatprep.subr.bf16.mxu0 0
    %261 = vmatpush2.bf16.msra.mxu0 0
    %262 = vmatprep.mubr.bf16.mxu0 0
    %263 = vmatmul.mubr.bf16.gmra.mxu0 %v158
    %v264 = vpop.f32.mrf.mxu0
    %v265 = vadd.f32 %v180, %v264
    %v266 = vpop.f32.mrf.mxu0
    %v267 = vpop.f32.mrf.mxu0
    %v268 = vpop.f32.mrf.mxu0
    %269 = vdwg.mxu0
    %v270 = vxor.u32 %v265, 2147483648
    %v271 = vmul.f32 %v270, 1.442695
    %v272 = vpow.pop %v271
    %v273 = vadd.f32 %v272, 1.0
    %v274 = vrcp.pop %v273
    %v275 = vmul.f32 1.0, %v274
    %276 = vst [vmem:[#allocation8] sm:$0x3] %v275
    // Predicated region
    $region34: #{tpu_custom_call.1} parent=1 // pred_check
      _
    $region35: #{tpu_custom_call.1} parent=1 // pred_check_branch
      %278 = sbr.rel (0) target = $region37
    $region36: #{tpu_custom_call.1} parent=1 // pred_region
      %s280 = ssub.s32 32, 32
      %281 = vsyncadd [#allocation4], %s280
      %s283 = sshll.u32 [#allocation8], 4
      %s284 = int_to_ptr.vmem [resolvable:$true] %s283
      %286 = dma.vmem_to_hbm [thread:$0]  %s284, 32, %s5, [#allocation4]
    $region37: #{tpu_custom_call.1} parent=1 // pred_fallthru
      _
    // Predicated region
    $region38: #{tpu_custom_call.1} parent=1 // pred_check
      _
    $region39: #{tpu_custom_call.1} parent=1 // pred_check_branch
      %288 = sbr.rel (0) target = $region41
    $region40: #{tpu_custom_call.1} parent=1 // pred_region
      %289 = dma.done [#allocation4], 32
    $region41: #{tpu_custom_call.1} parent=1 // pred_fallthru
      _
    %290 = vsyncpa [#allocation3], 1
    %291 = vsyncpa [#allocation6], 1
    %292 = vsyncpa [#allocation4], 1

// kernel: tpu_custom_call.1
$region0: #{tpu_custom_call.1}
  #allocation0 [shape = 'u32[]', space=smem, size = 0x4, offset = 0x4, fixed_abs, tag = 'smem constant byte address 0x4 - core index']
  #allocation1 [shape = 'u32[144,128]{1,0:T(1,128)}', space=vmem, size = 0x12000, scoped, tag = 'internal scratch']
  %s0 = inlined_call_operand.hbm [shape: f32[2,4,256], index: 0, kind: input, shape index: {}]
  %s1 = inlined_call_operand.hbm [shape: bf16[4,128], index: 1, kind: input, shape index: {}]
  %s2 = inlined_call_operand.vmem [shape: f32[1,128], index: 2, kind: input, shape index: {}]
  %s3 = inlined_call_operand.hbm [shape: bf16[128,128], index: 3, kind: input, shape index: {}]
  %s4 = inlined_call_operand.vmem [shape: f32[1,128], index: 4, kind: input, shape index: {}]
  %s5 = inlined_call_operand.hbm [shape: f32[2,128], index: 5, kind: output, shape index: {}]
  %s6 = sld [smem:[#allocation0]]
  $region42: #{tpu_custom_call.1} parent=0
    _
  %s8 = ssub.s32 1, %s6
  %s9 = scalar_select 0, %s8, %s6
  $region1: #{tpu_custom_call.1} parent=0
    #allocation2 [shape = 'u8[8192]{0}', space=vmem, size = 0x2000, scoped, tag = 'input window, operand 0, single buffered']
    #allocation3 [shape = 's32[1]{0}', space=sflag, size = 0x4, scoped, tag = 'scoped memory for tpu_custom_call.1']
    #allocation4 [shape = 's32[1]{0}', space=sflag, size = 0x4, scoped, tag = 'scoped memory for tpu_custom_call.1']
    #allocation5 [shape = 'u8[1024]{0}', space=vmem, size = 0x400, scoped, tag = 'input window, operand 1, single buffered']
    #allocation6 [shape = 's32[1]{0}', space=sflag, size = 0x4, scoped, tag = 'scoped memory for tpu_custom_call.1']
    #allocation7 [shape = 'u8[32768]{0}', space=vmem, size = 0x8000, scoped, tag = 'input window, operand 3, single buffered']
    #allocation8 [shape = 'u8[1024]{0}', space=vmem, size = 0x400, scoped, tag = 'output window, operand 0, single buffered']
    %10 = vsyncpa [#allocation3], 0
    %11 = vsyncpa [#allocation6], 0
    %12 = vsyncpa [#allocation4], 0
    // Predicated region
    $region2: #{tpu_custom_call.1} parent=1 // pred_check
      _
    $region3: #{tpu_custom_call.1} parent=1 // pred_check_branch
      %14 = sbr.rel (0) target = $region5
    $region4: #{tpu_custom_call.1} parent=1 // pred_region
      %s16 = ssub.s32 256, 256
      %17 = vsyncadd [#allocation3], %s16
      %s18 = sshll.u32 [#allocation2], 4
      %s19 = int_to_ptr.vmem [resolvable:$true] %s18
      %24 = dma.hbm_to_vmem [thread:$0]  %s0, 256, %s19, [#allocation3], 128, 128, 8
    $region5: #{tpu_custom_call.1} parent=1 // pred_fallthru
      _
    // Predicated region
    $region6: #{tpu_custom_call.1} parent=1 // pred_check
      _
    $region7: #{tpu_custom_call.1} parent=1 // pred_check_branch
      %26 = sbr.rel (0) target = $region9
    $region8: #{tpu_custom_call.1} parent=1 // pred_region
      %s28 = ssub.s32 32, 32
      %29 = vsyncadd [#allocation6], %s28
      %s31 = sshll.u32 [#allocation5], 4
      %s32 = int_to_ptr.vmem [resolvable:$true] %s31
      %34 = dma.hbm_to_vmem [thread:$0]  %s1, 32, %s32, [#allocation6]
    $region9: #{tpu_custom_call.1} parent=1 // pred_fallthru
      _
    // Predicated region
    $region10: #{tpu_custom_call.1} parent=1 // pred_check
      _
    $region11: #{tpu_custom_call.1} parent=1 // pred_check_branch
      %36 = sbr.rel (0) target = $region13
    $region12: #{tpu_custom_call.1} parent=1 // pred_region
      _
    $region13: #{tpu_custom_call.1} parent=1 // pred_fallthru
      _
    // Predicated region
    $region14: #{tpu_custom_call.1} parent=1 // pred_check
      _
    $region15: #{tpu_custom_call.1} parent=1 // pred_check_branch
      %38 = sbr.rel (0) target = $region17
    $region16: #{tpu_custom_call.1} parent=1 // pred_region
      %s40 = ssub.s32 1024, 1024
      %41 = vsyncadd [#allocation6], %s40
      %s42 = sshll.u32 [#allocation7], 4
      %s43 = int_to_ptr.vmem [resolvable:$true] %s42
      %48 = dma.hbm_to_vmem [thread:$0]  %s3, 1024, %s43, [#allocation6], 64, 64, 4
    $region17: #{tpu_custom_call.1} parent=1 // pred_fallthru
      _
    // Predicated region
    $region18: #{tpu_custom_call.1} parent=1 // pred_check
      _
    $region19: #{tpu_custom_call.1} parent=1 // pred_check_branch
      %50 = sbr.rel (0) target = $region21
    $region20: #{tpu_custom_call.1} parent=1 // pred_region
      _
    $region21: #{tpu_custom_call.1} parent=1 // pred_fallthru
      _
    // Predicated region
    $region22: #{tpu_custom_call.1} parent=1 // pred_check
      _
    $region23: #{tpu_custom_call.1} parent=1 // pred_check_branch
      %52 = sbr.rel (0) target = $region25
    $region24: #{tpu_custom_call.1} parent=1 // pred_region
      %53 = dma.done [#allocation3], 256
    $region25: #{tpu_custom_call.1} parent=1 // pred_fallthru
      _
    // Predicated region
    $region26: #{tpu_custom_call.1} parent=1 // pred_check
      _
    $region27: #{tpu_custom_call.1} parent=1 // pred_check_branch
      %55 = sbr.rel (0) target = $region29
    $region28: #{tpu_custom_call.1} parent=1 // pred_region
      %56 = dma.done [#allocation6], 32
    $region29: #{tpu_custom_call.1} parent=1 // pred_fallthru
      _
    // Predicated region
    $region30: #{tpu_custom_call.1} parent=1 // pred_check
      _
    $region31: #{tpu_custom_call.1} parent=1 // pred_check_branch
      %58 = sbr.rel (0) target = $region33
    $region32: #{tpu_custom_call.1} parent=1 // pred_region
      %59 = dma.done [#allocation6], 1024
    $region33: #{tpu_custom_call.1} parent=1 // pred_fallthru
      _
    %v61 = vld [vmem:[#allocation2] sm:$0xff]
    %v62 = vld [vmem:[#allocation2 + $0x8] sm:$0xff]
    %v65 = vcombine.high %v61, %v61
    %v66 = vcombine.high %v62, %v62
    %vm69 = vcmask 1043456
    %v70 = vsel %vm69, %v61, 0.0
    %v71 = vsel %vm69, %v65, 0.0
    %v72 = vadd.f32 %v70, %v71
    %73 = vadd.xlane.f32.xlu0 %v72
    %v74 = vpop.xlane.xlu0 %73
    %v75 = vsel %vm69, %v62, 0.0
    %v76 = vsel %vm69, %v66, 0.0
    %v77 = vadd.f32 %v75, %v76
    %78 = vadd.xlane.f32.xlu0 %v77
    %v79 = vpop.xlane.xlu0 %78
    %v80 = vmul.f32 %v74, 0.00390625
    %v81 = vmul.f32 %v79, 0.00390625
    %v82 = vpack.c.bf16 %v80, %v80
    %v83 = vpack.c.bf16 %v81, %v81
    %v84 = vld [vmem:[#allocation5] sm:$0x3]
    %v85 = vld [vmem:[%s2] sm:$0x1]
    %v87 = vlaneseq
    %v88 = vshrl.u32 %v87, 7
    %v89 = vsub.s32 0, %v88
    %v90 = vrot.slane %v85, %v89
    %v94 = vunpack.c.l.b16 %v82
    %v95 = vunpack.c.l.b16 %v83
    %v96 = vlaneseq
    %v97 = vand.u32 %v96, 127
    %v98 = vlaneseq
    %v99 = vshrl.u32 %v98, 7
    %v100 = vsub.s32 %v97, %v99
    %v101 = vrot.slane %v94, %v100
    %v102 = vlaneseq
    %v103 = vshrl.u32 %v102, 7
    %v104 = vsub.s32 %v97, %v103
    %v105 = vrot.slane %v95, %v104
    %vm106 = vcmask 1041409
    %v107 = vsel %vm106, %v105, %v101
    %v108 = vpack.c.b16 %v107, %v107
    %vm109 = vcmask 31744
    %v111 = vsel %vm109, %v108, 0
    %vm113 = vcmask 1041408
    %v115 = vsel %vm113, %v84, 0
    %117 = vmatprep.subr.bf16.mxu0 0
    %118 = vmatpush1.bf16.msra.mxu0 0
    %119 = vmatprep.subr.bf16.mxu0 0
    %120 = vmatpush1.bf16.msra.mxu0 0
    %121 = vmatprep.subr.bf16.mxu0 0
    %122 = vmatpush1.bf16.msra.mxu0 0
    %123 = vmatprep.subr.bf16.mxu0 0
    %124 = vmatpush1.bf16.msra.mxu0 0
    %125 = vmatprep.subr.bf16.mxu0 0
    %126 = vmatpush1.bf16.msra.mxu0 0
    %127 = vmatprep.subr.bf16.mxu0 0
    %128 = vmatpush1.bf16.msra.mxu0 0
    %129 = vmatprep.subr.bf16.mxu0 0
    %130 = vmatpush1.bf16.msra.mxu0 0
    %131 = vmatprep.subr.bf16.mxu0 0
    %132 = vmatpush1.bf16.msra.mxu0 %v115
    %133 = vmatprep.subr.bf16.mxu0 0
    %134 = vmatpush2.bf16.msra.mxu0 0
    %135 = vmatprep.subr.bf16.mxu0 0
    %136 = vmatpush2.bf16.msra.mxu0 0
    %137 = vmatprep.subr.bf16.mxu0 0
    %138 = vmatpush2.bf16.msra.mxu0 0
    %139 = vmatprep.subr.bf16.mxu0 0
    %140 = vmatpush2.bf16.msra.mxu0 0
    %141 = vmatprep.subr.bf16.mxu0 0
    %142 = vmatpush2.bf16.msra.mxu0 0
    %143 = vmatprep.subr.bf16.mxu0 0
    %144 = vmatpush2.bf16.msra.mxu0 0
    %145 = vmatprep.subr.bf16.mxu0 0
    %146 = vmatpush2.bf16.msra.mxu0 0
    %147 = vmatprep.subr.bf16.mxu0 0
    %148 = vmatpush2.bf16.msra.mxu0 0
    %149 = vmatprep.mubr.bf16.mxu0 0
    %150 = vmatmul.mubr.bf16.gmra.mxu0 %v111
    %v151 = vpop.f32.mrf.mxu0
    %v152 = vadd.f32 %v90, %v151
    %v153 = vpop.f32.mrf.mxu0
    %v154 = vpop.f32.mrf.mxu0
    %v155 = vpop.f32.mrf.mxu0
    %156 = vdwg.mxu0
    %v157 = vmax.f32 %v152, 0.0
    %v158 = vpack.c.bf16 %v157, %v157
    %v159 = vld [vmem:[#allocation7] sm:$0xf]
    %v160 = vld [vmem:[#allocation7 + $0x4] sm:$0xf]
    %v161 = vld [vmem:[#allocation7 + $0x8] sm:$0xf]
    %v162 = vld [vmem:[#allocation7 + $0xc] sm:$0xf]
    %v163 = vld [vmem:[#allocation7 + $0x10] sm:$0xf]
    %v164 = vld [vmem:[#allocation7 + $0x14] sm:$0xf]
    %v165 = vld [vmem:[#allocation7 + $0x18] sm:$0xf]
    %v166 = vld [vmem:[#allocation7 + $0x1c] sm:$0xf]
    %v167 = vld [vmem:[#allocation7 + $0x20] sm:$0xf]
    %v168 = vld [vmem:[#allocation7 + $0x24] sm:$0xf]
    %v169 = vld [vmem:[#allocation7 + $0x28] sm:$0xf]
    %v170 = vld [vmem:[#allocation7 + $0x2c] sm:$0xf]
    %v171 = vld [vmem:[#allocation7 + $0x30] sm:$0xf]
    %v172 = vld [vmem:[#allocation7 + $0x34] sm:$0xf]
    %v173 = vld [vmem:[#allocation7 + $0x38] sm:$0xf]
    %v174 = vld [vmem:[#allocation7 + $0x3c] sm:$0xf]
    %v175 = vld [vmem:[%s4] sm:$0x1]
    %v177 = vlaneseq
    %v178 = vshrl.u32 %v177, 7
    %v179 = vsub.s32 0, %v178
    %v180 = vrot.slane %v175, %v179
    %v198 = vunpack.c.l.b16 %v159
    %v199 = vunpack.c.l.b16 %v160
    %v200 = vunpack.c.l.b16 %v161
    %v201 = vunpack.c.l.b16 %v162
    %v202 = vunpack.c.l.b16 %v163
    %v203 = vunpack.c.l.b16 %v164
    %v204 = vunpack.c.l.b16 %v165
    %v205 = vunpack.c.l.b16 %v166
    %v206 = vunpack.c.l.b16 %v167
    %v207 = vunpack.c.l.b16 %v168
    %v208 = vunpack.c.l.b16 %v169
    %v209 = vunpack.c.l.b16 %v170
    %v210 = vunpack.c.l.b16 %v171
    %v211 = vunpack.c.l.b16 %v172
    %v212 = vunpack.c.l.b16 %v173
    %v213 = vunpack.c.l.b16 %v174
    %v214 = vpack.c.b16 %v199, %v198
    %v215 = vpack.c.b16 %v201, %v200
    %v216 = vpack.c.b16 %v203, %v202
    %v217 = vpack.c.b16 %v205, %v204
    %v218 = vpack.c.b16 %v207, %v206
    %v219 = vpack.c.b16 %v209, %v208
    %v220 = vpack.c.b16 %v211, %v210
    %v221 = vpack.c.b16 %v213, %v212
    %230 = vmatprep.subr.bf16.mxu0 0
    %231 = vmatpush1.bf16.msra.mxu0 %v221
    %232 = vmatprep.subr.bf16.mxu0 0
    %233 = vmatpush1.bf16.msra.mxu0 %v220
    %234 = vmatprep.subr.bf16.mxu0 0
    %235 = vmatpush1.bf16.msra.mxu0 %v219
    %236 = vmatprep.subr.bf16.mxu0 0
    %237 = vmatpush1.bf16.msra.mxu0 %v218
    %238 = vmatprep.subr.bf16.mxu0 0
    %239 = vmatpush1.bf16.msra.mxu0 %v217
    %240 = vmatprep.subr.bf16.mxu0 0
    %241 = vmatpush1.bf16.msra.mxu0 %v216
    %242 = vmatprep.subr.bf16.mxu0 0
    %243 = vmatpush1.bf16.msra.mxu0 %v215
    %244 = vmatprep.subr.bf16.mxu0 0
    %245 = vmatpush1.bf16.msra.mxu0 %v214
    %246 = vmatprep.subr.bf16.mxu0 0
    %247 = vmatpush2.bf16.msra.mxu0 0
    %248 = vmatprep.subr.bf16.mxu0 0
    %249 = vmatpush2.bf16.msra.mxu0 0
    %250 = vmatprep.subr.bf16.mxu0 0
    %251 = vmatpush2.bf16.msra.mxu0 0
    %252 = vmatprep.subr.bf16.mxu0 0
    %253 = vmatpush2.bf16.msra.mxu0 0
    %254 = vmatprep.subr.bf16.mxu0 0
    %255 = vmatpush2.bf16.msra.mxu0 0
    %256 = vmatprep.subr.bf16.mxu0 0
    %257 = vmatpush2.bf16.msra.mxu0 0
    %258 = vmatprep.subr.bf16.mxu0 0
    %259 = vmatpush2.bf16.msra.mxu0 0
    %260 = vmatprep.subr.bf16.mxu0 0
    %261 = vmatpush2.bf16.msra.mxu0 0
    %262 = vmatprep.mubr.bf16.mxu0 0
    %263 = vmatmul.mubr.bf16.gmra.mxu0 %v158
    %v264 = vpop.f32.mrf.mxu0
    %v265 = vadd.f32 %v180, %v264
    %v266 = vpop.f32.mrf.mxu0
    %v267 = vpop.f32.mrf.mxu0
    %v268 = vpop.f32.mrf.mxu0
    %269 = vdwg.mxu0
    %v270 = vxor.u32 %v265, 2147483648
    %v271 = vmul.f32 %v270, 1.442695
    %v272 = vpow.pop %v271
    %v273 = vadd.f32 %v272, 1.0
    %v274 = vrcp.pop %v273
    %v275 = vmul.f32 1.0, %v274
    %276 = vst [vmem:[#allocation8] sm:$0x3] %v275
    // Predicated region
    $region34: #{tpu_custom_call.1} parent=1 // pred_check
      _
    $region35: #{tpu_custom_call.1} parent=1 // pred_check_branch
      %278 = sbr.rel (0) target = $region37
    $region36: #{tpu_custom_call.1} parent=1 // pred_region
      %s280 = ssub.s32 32, 32
      %281 = vsyncadd [#allocation4], %s280
      %s283 = sshll.u32 [#allocation8], 4
      %s284 = int_to_ptr.vmem [resolvable:$true] %s283
      %286 = dma.vmem_to_hbm [thread:$0]  %s284, 32, %s5, [#allocation4]
    $region37: #{tpu_custom_call.1} parent=1 // pred_fallthru
      _
    // Predicated region
    $region38: #{tpu_custom_call.1} parent=1 // pred_check
      _
    $region39: #{tpu_custom_call.1} parent=1 // pred_check_branch
      %288 = sbr.rel (0) target = $region41
    $region40: #{tpu_custom_call.1} parent=1 // pred_region
      %289 = dma.done [#allocation4], 32
    $region41: #{tpu_custom_call.1} parent=1 // pred_fallthru
      _
    %290 = vsyncpa [#allocation3], 1
    %291 = vsyncpa [#allocation6], 1
    %292 = vsyncpa [#allocation4], 1

</llo_original>
